<compile_context>
chip_gen: v7x
topology: tpu7x:2x2x1
jax: 0.10.0
libtpu: 0.0.40
codegen_flags: <defaults>
</compile_context>

<pallas_src>
import jax
import jax.numpy as jnp
from jax.experimental import pallas as pl
from jax.experimental.pallas import tpu as pltpu


def _round_up(n: int, m: int) -> int:
    return ((n + m - 1) // m) * m


_MAX_TM = 512  # 512x784 bf16 x+out, double-buffered ~= 3.2 MiB: safe on v5e/v6e/v7x


def _choose_tiling(B: int):
    """Pick (tm, b_pad) for the batch dimension.

    Pads the batch only to the 16-row sublane multiple (no padding when B % 16 == 0)
    and prefers >= 2 grid steps with >= 128-row tiles so both v7x TensorCores are fed,
    while keeping tiles big enough to amortize the ~0.35 us/step pipeline overhead.
    """
    b_pad = _round_up(B, 16)
    if b_pad <= 256:
        return b_pad, b_pad  # tiny batch: a single full block is cheapest
    # Largest multiple-of-16 divisor of b_pad in [128, _MAX_TM] -> >= 2 grid steps.
    start = min(_MAX_TM, (b_pad // 2) // 16 * 16)
    for tm in range(start, 127, -16):
        if b_pad % tm == 0:
            return tm, b_pad
    # No divisor in range (e.g. b_pad = 16 * prime): single block if it fits nicely,
    # else pad the batch up to a multiple of _MAX_TM (costs one pad + one slice copy).
    if b_pad <= 1024:
        return b_pad, b_pad
    return _MAX_TM, _round_up(B, _MAX_TM)


def autoencoder_kernel(x_ref, w1_ref, b1_ref, w2_ref, b2_ref, out_ref):
    # Encoder: z = relu(x @ W1 + b1)   (bf16 MXU inputs, f32 accumulation)
    x = x_ref[...].astype(jnp.bfloat16)
    z = jnp.dot(x, w1_ref[...], preferred_element_type=jnp.float32) + b1_ref[...]
    z = jnp.maximum(z, 0.0)
    # Decoder: r = relu(z @ W2 + b2)
    r = jnp.dot(z.astype(jnp.bfloat16), w2_ref[...],
                preferred_element_type=jnp.float32) + b2_ref[...]
    r = jnp.maximum(r, 0.0)
    out_ref[...] = r.astype(out_ref.dtype)


def prepare_params(w1, b1, w2, b2):
    """One-time prep: lane-pad the hidden dim (64 -> 128) and cast weights to bf16.

    The padded hidden columns have zero weights and zero bias, so they produce
    relu(0) = 0 activations that contribute nothing to the decoder matmul.
    """
    D, H = w1.shape
    assert w2.shape == (H, D) and b1.shape == (1, H) and b2.shape == (1, D)
    h_pad = _round_up(H, 128)
    w1_p = jnp.pad(w1, ((0, 0), (0, h_pad - H))).astype(jnp.bfloat16)
    b1_p = jnp.pad(b1.astype(jnp.float32), ((0, 0), (0, h_pad - H)))
    w2_p = jnp.pad(w2, ((0, h_pad - H), (0, 0))).astype(jnp.bfloat16)
    b2_p = b2.astype(jnp.float32)
    return w1_p, b1_p, w2_p, b2_p


def autoencoder_forward(x, w1_p, b1_p, w2_p, b2_p):
    """x: [B, D] (bf16 preferred, f32 also fine); prepared params from prepare_params.

    Returns relu(relu(x @ W1 + b1) @ W2 + b2) with dtype == x.dtype.
    """
    B, D = x.shape
    h_pad = w1_p.shape[1]
    assert w1_p.shape == (D, h_pad) and w2_p.shape == (h_pad, D)
    assert b1_p.shape == (1, h_pad) and b2_p.shape == (1, D)

    tm, b_pad = _choose_tiling(B)
    x_p = x if b_pad == B else jnp.pad(x, ((0, b_pad - B), (0, 0)))
    out_dtype = x.dtype

    act_bytes = jnp.dtype(out_dtype).itemsize
    cost = pl.CostEstimate(
        flops=4 * b_pad * D * h_pad,                  # two matmuls
        transcendentals=0,
        bytes_accessed=(2 * b_pad * D * act_bytes     # x in + out
                        + w1_p.size * 2 + w2_p.size * 2
                        + b1_p.size * 4 + b2_p.size * 4),
    )

    out_p = pl.pallas_call(
        autoencoder_kernel,
        out_shape=jax.ShapeDtypeStruct((b_pad, D), out_dtype),
        grid=(b_pad // tm,),
        in_specs=[
            pl.BlockSpec((tm, D), lambda i: (i, 0)),      # x tile: streamed
            pl.BlockSpec((D, h_pad), lambda i: (0, 0)),   # W1: VMEM-resident
            pl.BlockSpec((1, h_pad), lambda i: (0, 0)),   # b1: VMEM-resident
            pl.BlockSpec((h_pad, D), lambda i: (0, 0)),   # W2: VMEM-resident
            pl.BlockSpec((1, D), lambda i: (0, 0)),       # b2: VMEM-resident
        ],
        out_specs=pl.BlockSpec((tm, D), lambda i: (i, 0)),
        compiler_params=pltpu.CompilerParams(
            dimension_semantics=("parallel",),
        ),
        cost_estimate=cost,
    )(x_p, w1_p, b1_p, w2_p, b2_p)

    return out_p if b_pad == B else out_p[:B]


def init_params(key, input_size=784, hidden_size=64, dtype=jnp.float32):
    """Deterministic init mirroring nn.Linear's U(-1/sqrt(fan_in), 1/sqrt(fan_in)).

    PyTorch stores weight as (out, in); we sample the transposed (in, out) weight
    directly so the kernel computes y = x @ W + b.
    """
    k1, k2, k3, k4 = jax.random.split(key, 4)
    bound1 = 1.0 / jnp.sqrt(jnp.asarray(input_size, dtype))
    bound2 = 1.0 / jnp.sqrt(jnp.asarray(hidden_size, dtype))
    w1 = jax.random.uniform(k1, (input_size, hidden_size), dtype, -bound1, bound1)
    b1 = jax.random.uniform(k2, (1, hidden_size), dtype, -bound1, bound1)
    w2 = jax.random.uniform(k3, (hidden_size, input_size), dtype, -bound2, bound2)
    b2 = jax.random.uniform(k4, (1, input_size), dtype, -bound2, bound2)
    return w1, b1, w2, b2


if __name__ == "__main__":
    key = jax.random.PRNGKey(0)
    kx, kp = jax.random.split(key)

    B, D, H = 8, 784, 64
    w1, b1, w2, b2 = init_params(kp, input_size=D, hidden_size=H)
    params = prepare_params(w1, b1, w2, b2)        # one-time pad + bf16 cast

    # bf16 activations: x and the output each stream at 2 B/elem (the kernel is
    # HBM-bound). Passing f32 x also works; the kernel casts to bf16 for the MXU.
    x = jax.random.normal(kx, (B, D), jnp.float32).astype(jnp.bfloat16)

    fwd = jax.jit(autoencoder_forward)
    out = jax.block_until_ready(fwd(x, *params))
    assert out.shape == (B, D) and out.dtype == x.dtype

    # Reference matching the kernel's numerics (bf16 matmul inputs, f32 accumulation).
    def bf(a):
        return a.astype(jnp.bfloat16).astype(jnp.float32)

    xf = x.astype(jnp.float32)
    z_ref = jnp.maximum(bf(xf) @ bf(w1) + b1, 0.0)
    r_ref = jnp.maximum(bf(z_ref) @ bf(w2) + b2, 0.0)
    err = jnp.max(jnp.abs(out.astype(jnp.float32) - r_ref))
    assert err < 5e-2, err

    print("KERNEL_OK")
</pallas_src>

<mosaic_0001>
module attributes {stable_mosaic.version = 11 : i64} {
  func.func @autoencoder_kernel(%arg0: i32, %arg1: memref<16x784xbf16, #tpu.memory_space<vmem>>, %arg2: memref<784x128xbf16, #tpu.memory_space<vmem>>, %arg3: memref<1x128xf32, #tpu.memory_space<vmem>>, %arg4: memref<128x784xbf16, #tpu.memory_space<vmem>>, %arg5: memref<1x784xf32, #tpu.memory_space<vmem>>, %arg6: memref<16x784xbf16, #tpu.memory_space<vmem>>) attributes {dimension_semantics = [#tpu.dimension_semantics<parallel>], iteration_bounds = array<i64: 1>, scalar_prefetch = 0 : i64, scratch_operands = 0 : i64, tpu.core_type = #tpu.core_type<tc>, window_params = [{transform_indices = @transform_0, window_bounds = array<i64: 16, 784>}, {pipeline_mode = #tpu.pipeline_mode<synchronous>, transform_indices = @transform_1, window_bounds = array<i64: 784, 128>}, {pipeline_mode = #tpu.pipeline_mode<synchronous>, transform_indices = @transform_2, window_bounds = array<i64: 1, 128>}, {pipeline_mode = #tpu.pipeline_mode<synchronous>, transform_indices = @transform_3, window_bounds = array<i64: 128, 784>}, {pipeline_mode = #tpu.pipeline_mode<synchronous>, transform_indices = @transform_4, window_bounds = array<i64: 1, 784>}, {transform_indices = @transform_5, window_bounds = array<i64: 16, 784>}]} {
    %c0 = arith.constant 0 : index
    %c0_0 = arith.constant 0 : index
    %0 = vector.load %arg1[%c0, %c0_0] : memref<16x784xbf16, #tpu.memory_space<vmem>>, vector<16x784xbf16>
    %c0_1 = arith.constant 0 : index
    %c0_2 = arith.constant 0 : index
    %1 = vector.load %arg2[%c0_1, %c0_2] : memref<784x128xbf16, #tpu.memory_space<vmem>>, vector<784x128xbf16>
    %cst = arith.constant dense<0.000000e+00> : vector<16x128xf32>
    %2 = tpu.matmul %0, %1, %cst {dimension_numbers = #tpu.dot_dimension_numbers<[1], [0], [0], [1], [0, 0, 1, 1], [], []>} : vector<16x784xbf16>, vector<784x128xbf16>, vector<16x128xf32> -> vector<16x128xf32>
    %c0_3 = arith.constant 0 : index
    %c0_4 = arith.constant 0 : index
    %3 = vector.load %arg3[%c0_3, %c0_4] : memref<1x128xf32, #tpu.memory_space<vmem>>, vector<1x128xf32>
    %4 = vector.broadcast %3 : vector<1x128xf32> to vector<16x128xf32>
    %5 = arith.addf %2, %4 : vector<16x128xf32>
    %cst_5 = arith.constant 0.000000e+00 : f32
    %6 = vector.broadcast %cst_5 : f32 to vector<16x128xf32>
    %7 = arith.maximumf %5, %6 : vector<16x128xf32>
    %8 = arith.truncf %7 : vector<16x128xf32> to vector<16x128xbf16>
    %c0_6 = arith.constant 0 : index
    %c0_7 = arith.constant 0 : index
    %9 = vector.load %arg4[%c0_6, %c0_7] : memref<128x784xbf16, #tpu.memory_space<vmem>>, vector<128x784xbf16>
    %cst_8 = arith.constant dense<0.000000e+00> : vector<16x784xf32>
    %10 = tpu.matmul %8, %9, %cst_8 {dimension_numbers = #tpu.dot_dimension_numbers<[1], [0], [0], [1], [0, 0, 1, 1], [], []>} : vector<16x128xbf16>, vector<128x784xbf16>, vector<16x784xf32> -> vector<16x784xf32>
    %c0_9 = arith.constant 0 : index
    %c0_10 = arith.constant 0 : index
    %11 = vector.load %arg5[%c0_9, %c0_10] : memref<1x784xf32, #tpu.memory_space<vmem>>, vector<1x784xf32>
    %12 = vector.broadcast %11 : vector<1x784xf32> to vector<16x784xf32>
    %13 = arith.addf %10, %12 : vector<16x784xf32>
    %cst_11 = arith.constant 0.000000e+00 : f32
    %14 = vector.broadcast %cst_11 : f32 to vector<16x784xf32>
    %15 = arith.maximumf %13, %14 : vector<16x784xf32>
    %16 = arith.truncf %15 : vector<16x784xf32> to vector<16x784xbf16>
    %c0_12 = arith.constant 0 : index
    %c0_13 = arith.constant 0 : index
    %17 = vector.load %arg6[%c0_12, %c0_13] : memref<16x784xbf16, #tpu.memory_space<vmem>>, vector<16x784xbf16>
    tpu.vector_store %arg6[%c0_12, %c0_13], %16 {strides = array<i32>} : memref<16x784xbf16, #tpu.memory_space<vmem>>, vector<16x784xbf16>,
    return
  }
  func.func @transform_0(%arg0: i32) -> (i32, i32) {
    %c0_i32 = arith.constant 0 : i32
    %c0_i32_0 = arith.constant 0 : i32
    return %arg0, %c0_i32 : i32, i32
  }
  func.func @transform_1(%arg0: i32) -> (i32, i32) {
    %c0_i32 = arith.constant 0 : i32
    %c0_i32_0 = arith.constant 0 : i32
    %c0_i32_1 = arith.constant 0 : i32
    return %c0_i32, %c0_i32_0 : i32, i32
  }
  func.func @transform_2(%arg0: i32) -> (i32, i32) {
    %c0_i32 = arith.constant 0 : i32
    %c0_i32_0 = arith.constant 0 : i32
    %c0_i32_1 = arith.constant 0 : i32
    return %c0_i32, %c0_i32_0 : i32, i32
  }
  func.func @transform_3(%arg0: i32) -> (i32, i32) {
    %c0_i32 = arith.constant 0 : i32
    %c0_i32_0 = arith.constant 0 : i32
    %c0_i32_1 = arith.constant 0 : i32
    return %c0_i32, %c0_i32_0 : i32, i32
  }
  func.func @transform_4(%arg0: i32) -> (i32, i32) {
    %c0_i32 = arith.constant 0 : i32
    %c0_i32_0 = arith.constant 0 : i32
    %c0_i32_1 = arith.constant 0 : i32
    return %c0_i32, %c0_i32_0 : i32, i32
  }
  func.func @transform_5(%arg0: i32) -> (i32, i32) {
    %c0_i32 = arith.constant 0 : i32
    %c0_i32_0 = arith.constant 0 : i32
    return %arg0, %c0_i32 : i32, i32
  }
}

</mosaic_0001>

<llo_original>
// kernel: autoencoder_forward.1
$region0: #{autoencoder_forward.1}
  #allocation0 [shape = 'u32[]', space=smem, size = 0x4, offset = 0x4, fixed_abs, tag = 'smem constant byte address 0x4 - core index']
  #allocation1 [shape = 'u32[144,128]{1,0:T(1,128)}', space=vmem, size = 0x12000, scoped, tag = 'internal scratch']
  %s0 = inlined_call_operand.vmem [shape: bf16[16,784], index: 0, kind: input, shape index: {}]
  %s1 = inlined_call_operand.vmem [shape: bf16[784,128], index: 1, kind: input, shape index: {}]
  %s2 = inlined_call_operand.vmem [shape: f32[1,128], index: 2, kind: input, shape index: {}]
  %s3 = inlined_call_operand.vmem [shape: bf16[128,784], index: 3, kind: input, shape index: {}]
  %s4 = inlined_call_operand.vmem [shape: f32[1,784], index: 4, kind: input, shape index: {}]
  %s5 = inlined_call_operand.vmem [shape: bf16[16,784], index: 5, kind: output, shape index: {}]
  %s6 = sld [smem:[#allocation0]]
  $region30: #{autoencoder_forward.1} parent=0
    _
  %s8 = ssub.s32 1, %s6
  %s9 = scalar_select 0, %s8, %s6
  // Predicated region
  $region2: #{autoencoder_forward.1} parent=0 // pred_check
    _
  $region3: #{autoencoder_forward.1} parent=0 // pred_check_branch
    %11 = sbr.rel (0) target = $region5
  $region4: #{autoencoder_forward.1} parent=0 // pred_region
    _
  $region5: #{autoencoder_forward.1} parent=0 // pred_fallthru
    _
  // Predicated region
  $region6: #{autoencoder_forward.1} parent=0 // pred_check
    _
  $region7: #{autoencoder_forward.1} parent=0 // pred_check_branch
    %13 = sbr.rel (0) target = $region9
  $region8: #{autoencoder_forward.1} parent=0 // pred_region
    _
  $region9: #{autoencoder_forward.1} parent=0 // pred_fallthru
    _
  // Predicated region
  $region10: #{autoencoder_forward.1} parent=0 // pred_check
    _
  $region11: #{autoencoder_forward.1} parent=0 // pred_check_branch
    %15 = sbr.rel (0) target = $region13
  $region12: #{autoencoder_forward.1} parent=0 // pred_region
    _
  $region13: #{autoencoder_forward.1} parent=0 // pred_fallthru
    _
  // Predicated region
  $region14: #{autoencoder_forward.1} parent=0 // pred_check
    _
  $region15: #{autoencoder_forward.1} parent=0 // pred_check_branch
    %17 = sbr.rel (0) target = $region17
  $region16: #{autoencoder_forward.1} parent=0 // pred_region
    _
  $region17: #{autoencoder_forward.1} parent=0 // pred_fallthru
    _
  // Predicated region
  $region18: #{autoencoder_forward.1} parent=0 // pred_check
    _
  $region19: #{autoencoder_forward.1} parent=0 // pred_check_branch
    %19 = sbr.rel (0) target = $region21
  $region20: #{autoencoder_forward.1} parent=0 // pred_region
    _
  $region21: #{autoencoder_forward.1} parent=0 // pred_fallthru
    _
  %v21 = vld [vmem:[%s0] sm:$0xff]
  %v22 = vld [vmem:[%s0 + $0x8] sm:$0xff]
  %v23 = vld [vmem:[%s0 + $0x10] sm:$0xff]
  %v24 = vld [vmem:[%s0 + $0x18] sm:$0xf]
  %v25 = vld [vmem:[%s0 + $0x1c] sm:$0xff]
  %v26 = vld [vmem:[%s0 + $0x24] sm:$0xff]
  %v27 = vld [vmem:[%s0 + $0x2c] sm:$0xff]
  %v28 = vld [vmem:[%s0 + $0x34] sm:$0xf]
  %v29 = vld [vmem:[%s1] sm:$0xf]
  %v30 = vld [vmem:[%s1 + $0x4] sm:$0xf]
  %v31 = vld [vmem:[%s1 + $0x8] sm:$0xf]
  %v32 = vld [vmem:[%s1 + $0xc] sm:$0xf]
  %v33 = vld [vmem:[%s1 + $0x10] sm:$0xf]
  %v34 = vld [vmem:[%s1 + $0x14] sm:$0xf]
  %v35 = vld [vmem:[%s1 + $0x18] sm:$0xf]
  %v36 = vld [vmem:[%s1 + $0x1c] sm:$0xf]
  %v37 = vld [vmem:[%s1 + $0x20] sm:$0xf]
  %v38 = vld [vmem:[%s1 + $0x24] sm:$0xf]
  %v39 = vld [vmem:[%s1 + $0x28] sm:$0xf]
  %v40 = vld [vmem:[%s1 + $0x2c] sm:$0xf]
  %v41 = vld [vmem:[%s1 + $0x30] sm:$0xf]
  %v42 = vld [vmem:[%s1 + $0x34] sm:$0xf]
  %v43 = vld [vmem:[%s1 + $0x38] sm:$0xf]
  %v44 = vld [vmem:[%s1 + $0x3c] sm:$0xf]
  %v45 = vld [vmem:[%s1 + $0x40] sm:$0xf]
  %v46 = vld [vmem:[%s1 + $0x44] sm:$0xf]
  %v47 = vld [vmem:[%s1 + $0x48] sm:$0xf]
  %v48 = vld [vmem:[%s1 + $0x4c] sm:$0xf]
  %v49 = vld [vmem:[%s1 + $0x50] sm:$0xf]
  %v50 = vld [vmem:[%s1 + $0x54] sm:$0xf]
  %v51 = vld [vmem:[%s1 + $0x58] sm:$0xf]
  %v52 = vld [vmem:[%s1 + $0x5c] sm:$0xf]
  %v53 = vld [vmem:[%s1 + $0x60] sm:$0xf]
  %v54 = vld [vmem:[%s1 + $0x64] sm:$0xf]
  %v55 = vld [vmem:[%s1 + $0x68] sm:$0xf]
  %v56 = vld [vmem:[%s1 + $0x6c] sm:$0xf]
  %v57 = vld [vmem:[%s1 + $0x70] sm:$0xf]
  %v58 = vld [vmem:[%s1 + $0x74] sm:$0xf]
  %v59 = vld [vmem:[%s1 + $0x78] sm:$0xf]
  %v60 = vld [vmem:[%s1 + $0x7c] sm:$0xf]
  %v61 = vld [vmem:[%s1 + $0x80] sm:$0xf]
  %v62 = vld [vmem:[%s1 + $0x84] sm:$0xf]
  %v63 = vld [vmem:[%s1 + $0x88] sm:$0xf]
  %v64 = vld [vmem:[%s1 + $0x8c] sm:$0xf]
  %v65 = vld [vmem:[%s1 + $0x90] sm:$0xf]
  %v66 = vld [vmem:[%s1 + $0x94] sm:$0xf]
  %v67 = vld [vmem:[%s1 + $0x98] sm:$0xf]
  %v68 = vld [vmem:[%s1 + $0x9c] sm:$0xf]
  %v69 = vld [vmem:[%s1 + $0xa0] sm:$0xf]
  %v70 = vld [vmem:[%s1 + $0xa4] sm:$0xf]
  %v71 = vld [vmem:[%s1 + $0xa8] sm:$0xf]
  %v72 = vld [vmem:[%s1 + $0xac] sm:$0xf]
  %v73 = vld [vmem:[%s1 + $0xb0] sm:$0xf]
  %v74 = vld [vmem:[%s1 + $0xb4] sm:$0xf]
  %v75 = vld [vmem:[%s1 + $0xb8] sm:$0xf]
  %v76 = vld [vmem:[%s1 + $0xbc] sm:$0xf]
  %v77 = vld [vmem:[%s1 + $0xc0] sm:$0xf]
  %v78 = vld [vmem:[%s1 + $0xc4] sm:$0xf]
  %v79 = vld [vmem:[%s1 + $0xc8] sm:$0xf]
  %v80 = vld [vmem:[%s1 + $0xcc] sm:$0xf]
  %v81 = vld [vmem:[%s1 + $0xd0] sm:$0xf]
  %v82 = vld [vmem:[%s1 + $0xd4] sm:$0xf]
  %v83 = vld [vmem:[%s1 + $0xd8] sm:$0xf]
  %v84 = vld [vmem:[%s1 + $0xdc] sm:$0xf]
  %v85 = vld [vmem:[%s1 + $0xe0] sm:$0xf]
  %v86 = vld [vmem:[%s1 + $0xe4] sm:$0xf]
  %v87 = vld [vmem:[%s1 + $0xe8] sm:$0xf]
  %v88 = vld [vmem:[%s1 + $0xec] sm:$0xf]
  %v89 = vld [vmem:[%s1 + $0xf0] sm:$0xf]
  %v90 = vld [vmem:[%s1 + $0xf4] sm:$0xf]
  %v91 = vld [vmem:[%s1 + $0xf8] sm:$0xf]
  %v92 = vld [vmem:[%s1 + $0xfc] sm:$0xf]
  %v93 = vld [vmem:[%s1 + $0x100] sm:$0xf]
  %v94 = vld [vmem:[%s1 + $0x104] sm:$0xf]
  %v95 = vld [vmem:[%s1 + $0x108] sm:$0xf]
  %v96 = vld [vmem:[%s1 + $0x10c] sm:$0xf]
  %v97 = vld [vmem:[%s1 + $0x110] sm:$0xf]
  %v98 = vld [vmem:[%s1 + $0x114] sm:$0xf]
  %v99 = vld [vmem:[%s1 + $0x118] sm:$0xf]
  %v100 = vld [vmem:[%s1 + $0x11c] sm:$0xf]
  %v101 = vld [vmem:[%s1 + $0x120] sm:$0xf]
  %v102 = vld [vmem:[%s1 + $0x124] sm:$0xf]
  %v103 = vld [vmem:[%s1 + $0x128] sm:$0xf]
  %v104 = vld [vmem:[%s1 + $0x12c] sm:$0xf]
  %v105 = vld [vmem:[%s1 + $0x130] sm:$0xf]
  %v106 = vld [vmem:[%s1 + $0x134] sm:$0xf]
  %v107 = vld [vmem:[%s1 + $0x138] sm:$0xf]
  %v108 = vld [vmem:[%s1 + $0x13c] sm:$0xf]
  %v109 = vld [vmem:[%s1 + $0x140] sm:$0xf]
  %v110 = vld [vmem:[%s1 + $0x144] sm:$0xf]
  %v111 = vld [vmem:[%s1 + $0x148] sm:$0xf]
  %v112 = vld [vmem:[%s1 + $0x14c] sm:$0xf]
  %v113 = vld [vmem:[%s1 + $0x150] sm:$0xf]
  %v114 = vld [vmem:[%s1 + $0x154] sm:$0xf]
  %v115 = vld [vmem:[%s1 + $0x158] sm:$0xf]
  %v116 = vld [vmem:[%s1 + $0x15c] sm:$0xf]
  %v117 = vld [vmem:[%s1 + $0x160] sm:$0xf]
  %v118 = vld [vmem:[%s1 + $0x164] sm:$0xf]
  %v119 = vld [vmem:[%s1 + $0x168] sm:$0xf]
  %v120 = vld [vmem:[%s1 + $0x16c] sm:$0xf]
  %v121 = vld [vmem:[%s1 + $0x170] sm:$0xf]
  %v122 = vld [vmem:[%s1 + $0x174] sm:$0xf]
  %v123 = vld [vmem:[%s1 + $0x178] sm:$0xf]
  %v124 = vld [vmem:[%s1 + $0x17c] sm:$0xf]
  %v125 = vld [vmem:[%s1 + $0x180] sm:$0xf]
  %v126 = vld [vmem:[%s1 + $0x184] sm:$0xf]
  %v127 = vld [vmem:[%s2] sm:$0x1]
  %v129 = vlaneseq
  %v130 = vshrl.u32 %v129, 7
  %v131 = vsub.s32 0, %v130
  %v132 = vrot.slane %v127, %v131
  %v142 = vunpack.c.l.b16 %v21
  %v143 = vunpack.c.h.b16 %v21
  %v144 = vunpack.c.l.b16 %v22
  %v145 = vunpack.c.h.b16 %v22
  %v146 = vunpack.c.l.b16 %v23
  %v147 = vunpack.c.h.b16 %v23
  %v148 = vunpack.c.l.b16 %v24
  %v149 = vunpack.c.l.b16 %v25
  %v150 = vunpack.c.h.b16 %v25
  %v151 = vunpack.c.l.b16 %v26
  %v152 = vunpack.c.h.b16 %v26
  %v153 = vunpack.c.l.b16 %v27
  %v154 = vunpack.c.h.b16 %v27
  %v155 = vunpack.c.l.b16 %v28
  %v156 = vpack.c.b16 %v149, %v142
  %v157 = vpack.c.b16 %v150, %v143
  %v158 = vpack.c.b16 %v151, %v144
  %v159 = vpack.c.b16 %v152, %v145
  %v160 = vpack.c.b16 %v153, %v146
  %v161 = vpack.c.b16 %v154, %v147
  %v162 = vpack.c.b16 %v155, %v148
  %v267 = vunpack.c.l.b16 %v29
  %v268 = vunpack.c.l.b16 %v30
  %v269 = vunpack.c.l.b16 %v31
  %v270 = vunpack.c.l.b16 %v32
  %v271 = vunpack.c.l.b16 %v33
  %v272 = vunpack.c.l.b16 %v34
  %v273 = vunpack.c.l.b16 %v35
  %v274 = vunpack.c.l.b16 %v36
  %v275 = vunpack.c.l.b16 %v37
  %v276 = vunpack.c.l.b16 %v38
  %v277 = vunpack.c.l.b16 %v39
  %v278 = vunpack.c.l.b16 %v40
  %v279 = vunpack.c.l.b16 %v41
  %v280 = vunpack.c.l.b16 %v42
  %v281 = vunpack.c.l.b16 %v43
  %v282 = vunpack.c.l.b16 %v44
  %v283 = vunpack.c.l.b16 %v45
  %v284 = vunpack.c.l.b16 %v46
  %v285 = vunpack.c.l.b16 %v47
  %v286 = vunpack.c.l.b16 %v48
  %v287 = vunpack.c.l.b16 %v49
  %v288 = vunpack.c.l.b16 %v50
  %v289 = vunpack.c.l.b16 %v51
  %v290 = vunpack.c.l.b16 %v52
  %v291 = vunpack.c.l.b16 %v53
  %v292 = vunpack.c.l.b16 %v54
  %v293 = vunpack.c.l.b16 %v55
  %v294 = vunpack.c.l.b16 %v56
  %v295 = vunpack.c.l.b16 %v57
  %v296 = vunpack.c.l.b16 %v58
  %v297 = vunpack.c.l.b16 %v59
  %v298 = vunpack.c.l.b16 %v60
  %v299 = vunpack.c.l.b16 %v61
  %v300 = vunpack.c.l.b16 %v62
  %v301 = vunpack.c.l.b16 %v63
  %v302 = vunpack.c.l.b16 %v64
  %v303 = vunpack.c.l.b16 %v65
  %v304 = vunpack.c.l.b16 %v66
  %v305 = vunpack.c.l.b16 %v67
  %v306 = vunpack.c.l.b16 %v68
  %v307 = vunpack.c.l.b16 %v69
  %v308 = vunpack.c.l.b16 %v70
  %v309 = vunpack.c.l.b16 %v71
  %v310 = vunpack.c.l.b16 %v72
  %v311 = vunpack.c.l.b16 %v73
  %v312 = vunpack.c.l.b16 %v74
  %v313 = vunpack.c.l.b16 %v75
  %v314 = vunpack.c.l.b16 %v76
  %v315 = vunpack.c.l.b16 %v77
  %v316 = vunpack.c.l.b16 %v78
  %v317 = vunpack.c.l.b16 %v79
  %v318 = vunpack.c.l.b16 %v80
  %v319 = vunpack.c.l.b16 %v81
  %v320 = vunpack.c.l.b16 %v82
  %v321 = vunpack.c.l.b16 %v83
  %v322 = vunpack.c.l.b16 %v84
  %v323 = vunpack.c.l.b16 %v85
  %v324 = vunpack.c.l.b16 %v86
  %v325 = vunpack.c.l.b16 %v87
  %v326 = vunpack.c.l.b16 %v88
  %v327 = vunpack.c.l.b16 %v89
  %v328 = vunpack.c.l.b16 %v90
  %v329 = vunpack.c.l.b16 %v91
  %v330 = vunpack.c.l.b16 %v92
  %v331 = vunpack.c.l.b16 %v93
  %v332 = vunpack.c.l.b16 %v94
  %v333 = vunpack.c.l.b16 %v95
  %v334 = vunpack.c.l.b16 %v96
  %v335 = vunpack.c.l.b16 %v97
  %v336 = vunpack.c.l.b16 %v98
  %v337 = vunpack.c.l.b16 %v99
  %v338 = vunpack.c.l.b16 %v100
  %v339 = vunpack.c.l.b16 %v101
  %v340 = vunpack.c.l.b16 %v102
  %v341 = vunpack.c.l.b16 %v103
  %v342 = vunpack.c.l.b16 %v104
  %v343 = vunpack.c.l.b16 %v105
  %v344 = vunpack.c.l.b16 %v106
  %v345 = vunpack.c.l.b16 %v107
  %v346 = vunpack.c.l.b16 %v108
  %v347 = vunpack.c.l.b16 %v109
  %v348 = vunpack.c.l.b16 %v110
  %v349 = vunpack.c.l.b16 %v111
  %v350 = vunpack.c.l.b16 %v112
  %v351 = vunpack.c.l.b16 %v113
  %v352 = vunpack.c.l.b16 %v114
  %v353 = vunpack.c.l.b16 %v115
  %v354 = vunpack.c.l.b16 %v116
  %v355 = vunpack.c.l.b16 %v117
  %v356 = vunpack.c.l.b16 %v118
  %v357 = vunpack.c.l.b16 %v119
  %v358 = vunpack.c.l.b16 %v120
  %v359 = vunpack.c.l.b16 %v121
  %v360 = vunpack.c.l.b16 %v122
  %v361 = vunpack.c.l.b16 %v123
  %v362 = vunpack.c.l.b16 %v124
  %v363 = vunpack.c.l.b16 %v125
  %v364 = vunpack.c.l.b16 %v126
  %v365 = vpack.c.b16 %v268, %v267
  %v366 = vpack.c.b16 %v270, %v269
  %v367 = vpack.c.b16 %v272, %v271
  %v368 = vpack.c.b16 %v274, %v273
  %v369 = vpack.c.b16 %v276, %v275
  %v370 = vpack.c.b16 %v278, %v277
  %v371 = vpack.c.b16 %v280, %v279
  %v372 = vpack.c.b16 %v282, %v281
  %v373 = vpack.c.b16 %v284, %v283
  %v374 = vpack.c.b16 %v286, %v285
  %v375 = vpack.c.b16 %v288, %v287
  %v376 = vpack.c.b16 %v290, %v289
  %v377 = vpack.c.b16 %v292, %v291
  %v378 = vpack.c.b16 %v294, %v293
  %v379 = vpack.c.b16 %v296, %v295
  %v380 = vpack.c.b16 %v298, %v297
  %v381 = vpack.c.b16 %v300, %v299
  %v382 = vpack.c.b16 %v302, %v301
  %v383 = vpack.c.b16 %v304, %v303
  %v384 = vpack.c.b16 %v306, %v305
  %v385 = vpack.c.b16 %v308, %v307
  %v386 = vpack.c.b16 %v310, %v309
  %v387 = vpack.c.b16 %v312, %v311
  %v388 = vpack.c.b16 %v314, %v313
  %v389 = vpack.c.b16 %v316, %v315
  %v390 = vpack.c.b16 %v318, %v317
  %v391 = vpack.c.b16 %v320, %v319
  %v392 = vpack.c.b16 %v322, %v321
  %v393 = vpack.c.b16 %v324, %v323
  %v394 = vpack.c.b16 %v326, %v325
  %v395 = vpack.c.b16 %v328, %v327
  %v396 = vpack.c.b16 %v330, %v329
  %v397 = vpack.c.b16 %v332, %v331
  %v398 = vpack.c.b16 %v334, %v333
  %v399 = vpack.c.b16 %v336, %v335
  %v400 = vpack.c.b16 %v338, %v337
  %v401 = vpack.c.b16 %v340, %v339
  %v402 = vpack.c.b16 %v342, %v341
  %v403 = vpack.c.b16 %v344, %v343
  %v404 = vpack.c.b16 %v346, %v345
  %v405 = vpack.c.b16 %v348, %v347
  %v406 = vpack.c.b16 %v350, %v349
  %v407 = vpack.c.b16 %v352, %v351
  %v408 = vpack.c.b16 %v354, %v353
  %v409 = vpack.c.b16 %v356, %v355
  %v410 = vpack.c.b16 %v358, %v357
  %v411 = vpack.c.b16 %v360, %v359
  %v412 = vpack.c.b16 %v362, %v361
  %v413 = vpack.c.b16 %v364, %v363
  %vm463 = vcmask 130048
  %v465 = vsel %vm463, %v162, 0
  %467 = vmatprep.subr.bf16.mxu0 0
  %468 = vmatpush1.bf16.msra.mxu0 %v365
  %469 = vmatprep.subr.bf16.mxu0 0
  %470 = vmatpush1.bf16.msra.mxu0 %v366
  %471 = vmatprep.subr.bf16.mxu0 0
  %472 = vmatpush1.bf16.msra.mxu0 %v367
  %473 = vmatprep.subr.bf16.mxu0 0
  %474 = vmatpush1.bf16.msra.mxu0 %v368
  %475 = vmatprep.subr.bf16.mxu0 0
  %476 = vmatpush1.bf16.msra.mxu0 %v369
  %477 = vmatprep.subr.bf16.mxu0 0
  %478 = vmatpush1.bf16.msra.mxu0 %v370
  %479 = vmatprep.subr.bf16.mxu0 0
  %480 = vmatpush1.bf16.msra.mxu0 %v371
  %481 = vmatprep.subr.bf16.mxu0 0
  %482 = vmatpush1.bf16.msra.mxu0 %v372
  %483 = vmatprep.subr.bf16.mxu0 0
  %484 = vmatpush1.bf16.msra.mxu0 %v373
  %485 = vmatprep.subr.bf16.mxu0 0
  %486 = vmatpush1.bf16.msra.mxu0 %v374
  %487 = vmatprep.subr.bf16.mxu0 0
  %488 = vmatpush1.bf16.msra.mxu0 %v375
  %489 = vmatprep.subr.bf16.mxu0 0
  %490 = vmatpush1.bf16.msra.mxu0 %v376
  %491 = vmatprep.subr.bf16.mxu0 0
  %492 = vmatpush1.bf16.msra.mxu0 %v377
  %493 = vmatprep.subr.bf16.mxu0 0
  %494 = vmatpush1.bf16.msra.mxu0 %v378
  %495 = vmatprep.subr.bf16.mxu0 0
  %496 = vmatpush1.bf16.msra.mxu0 %v379
  %497 = vmatprep.subr.bf16.mxu0 0
  %498 = vmatpush1.bf16.msra.mxu0 %v380
  %499 = vmatprep.mubr.bf16.mxu0 %v157
  %500 = vmatmul.mubr.bf16.gmra.mrb[0].mxu0 %v156
  %v501 = vpop.f32.mrb[0].mxu0
  %v502 = vadd.f32 %v132, %v501
  %v503 = vpop.f32.mrb[0].mxu0
  %v504 = vpop.f32.mrb[0].mxu0
  %v505 = vadd.f32 %v132, %v504
  %v506 = vpop.f32.mrb[0].mxu0
  %507 = vdwg.mxu0
  %508 = vmatprep.subr.bf16.mxu0 0
  %509 = vmatpush1.bf16.msra.mxu0 %v381
  %510 = vmatprep.subr.bf16.mxu0 0
  %511 = vmatpush1.bf16.msra.mxu0 %v382
  %512 = vmatprep.subr.bf16.mxu0 0
  %513 = vmatpush1.bf16.msra.mxu0 %v383
  %514 = vmatprep.subr.bf16.mxu0 0
  %515 = vmatpush1.bf16.msra.mxu0 %v384
  %516 = vmatprep.subr.bf16.mxu0 0
  %517 = vmatpush1.bf16.msra.mxu0 %v385
  %518 = vmatprep.subr.bf16.mxu0 0
  %519 = vmatpush1.bf16.msra.mxu0 %v386
  %520 = vmatprep.subr.bf16.mxu0 0
  %521 = vmatpush1.bf16.msra.mxu0 %v387
  %522 = vmatprep.subr.bf16.mxu0 0
  %523 = vmatpush1.bf16.msra.mxu0 %v388
  %524 = vmatprep.subr.bf16.mxu0 0
  %525 = vmatpush1.bf16.msra.mxu0 %v389
  %526 = vmatprep.subr.bf16.mxu0 0
  %527 = vmatpush1.bf16.msra.mxu0 %v390
  %528 = vmatprep.subr.bf16.mxu0 0
  %529 = vmatpush1.bf16.msra.mxu0 %v391
  %530 = vmatprep.subr.bf16.mxu0 0
  %531 = vmatpush1.bf16.msra.mxu0 %v392
  %532 = vmatprep.subr.bf16.mxu0 0
  %533 = vmatpush1.bf16.msra.mxu0 %v393
  %534 = vmatprep.subr.bf16.mxu0 0
  %535 = vmatpush1.bf16.msra.mxu0 %v394
  %536 = vmatprep.subr.bf16.mxu0 0
  %537 = vmatpush1.bf16.msra.mxu0 %v395
  %538 = vmatprep.subr.bf16.mxu0 0
  %539 = vmatpush1.bf16.msra.mxu0 %v396
  %540 = vmatprep.mubr.bf16.mxu0 %v159
  %541 = vmatmul.mubr.bf16.gmra.mrb[0].mxu0 %v158
  %v542 = vpop.f32.mrb[0].mxu0
  %v543 = vadd.f32 %v502, %v542
  %v544 = vpop.f32.mrb[0].mxu0
  %v545 = vpop.f32.mrb[0].mxu0
  %v546 = vadd.f32 %v505, %v545
  %v547 = vpop.f32.mrb[0].mxu0
  %548 = vdwg.mxu0
  %549 = vmatprep.subr.bf16.mxu0 0
  %550 = vmatpush1.bf16.msra.mxu0 %v397
  %551 = vmatprep.subr.bf16.mxu0 0
  %552 = vmatpush1.bf16.msra.mxu0 %v398
  %553 = vmatprep.subr.bf16.mxu0 0
  %554 = vmatpush1.bf16.msra.mxu0 %v399
  %555 = vmatprep.subr.bf16.mxu0 0
  %556 = vmatpush1.bf16.msra.mxu0 %v400
  %557 = vmatprep.subr.bf16.mxu0 0
  %558 = vmatpush1.bf16.msra.mxu0 %v401
  %559 = vmatprep.subr.bf16.mxu0 0
  %560 = vmatpush1.bf16.msra.mxu0 %v402
  %561 = vmatprep.subr.bf16.mxu0 0
  %562 = vmatpush1.bf16.msra.mxu0 %v403
  %563 = vmatprep.subr.bf16.mxu0 0
  %564 = vmatpush1.bf16.msra.mxu0 %v404
  %565 = vmatprep.subr.bf16.mxu0 0
  %566 = vmatpush1.bf16.msra.mxu0 %v405
  %567 = vmatprep.subr.bf16.mxu0 0
  %568 = vmatpush1.bf16.msra.mxu0 %v406
  %569 = vmatprep.subr.bf16.mxu0 0
  %570 = vmatpush1.bf16.msra.mxu0 %v407
  %571 = vmatprep.subr.bf16.mxu0 0
  %572 = vmatpush1.bf16.msra.mxu0 %v408
  %573 = vmatprep.subr.bf16.mxu0 0
  %574 = vmatpush1.bf16.msra.mxu0 %v409
  %575 = vmatprep.subr.bf16.mxu0 0
  %576 = vmatpush1.bf16.msra.mxu0 %v410
  %577 = vmatprep.subr.bf16.mxu0 0
  %578 = vmatpush1.bf16.msra.mxu0 %v411
  %579 = vmatprep.subr.bf16.mxu0 0
  %580 = vmatpush1.bf16.msra.mxu0 %v412
  %581 = vmatprep.mubr.bf16.mxu0 %v161
  %582 = vmatmul.mubr.bf16.gmra.mrb[0].mxu0 %v160
  %v583 = vpop.f32.mrb[0].mxu0
  %v584 = vadd.f32 %v543, %v583
  %v585 = vpop.f32.mrb[0].mxu0
  %v586 = vpop.f32.mrb[0].mxu0
  %v587 = vadd.f32 %v546, %v586
  %v588 = vpop.f32.mrb[0].mxu0
  %589 = vdwg.mxu0
  %590 = vmatprep.subr.bf16.mxu0 0
  %591 = vmatpush1.bf16.msra.mxu0 %v413
  %592 = vmatprep.subr.bf16.mxu0 0
  %593 = vmatpush1.bf16.msra.mxu0 0
  %594 = vmatprep.subr.bf16.mxu0 0
  %595 = vmatpush1.bf16.msra.mxu0 0
  %596 = vmatprep.subr.bf16.mxu0 0
  %597 = vmatpush1.bf16.msra.mxu0 0
  %598 = vmatprep.subr.bf16.mxu0 0
  %599 = vmatpush1.bf16.msra.mxu0 0
  %600 = vmatprep.subr.bf16.mxu0 0
  %601 = vmatpush1.bf16.msra.mxu0 0
  %602 = vmatprep.subr.bf16.mxu0 0
  %603 = vmatpush1.bf16.msra.mxu0 0
  %604 = vmatprep.subr.bf16.mxu0 0
  %605 = vmatpush1.bf16.msra.mxu0 0
  %606 = vmatprep.subr.bf16.mxu0 0
  %607 = vmatpush1.bf16.msra.mxu0 0
  %608 = vmatprep.subr.bf16.mxu0 0
  %609 = vmatpush1.bf16.msra.mxu0 0
  %610 = vmatprep.subr.bf16.mxu0 0
  %611 = vmatpush1.bf16.msra.mxu0 0
  %612 = vmatprep.subr.bf16.mxu0 0
  %613 = vmatpush1.bf16.msra.mxu0 0
  %614 = vmatprep.subr.bf16.mxu0 0
  %615 = vmatpush1.bf16.msra.mxu0 0
  %616 = vmatprep.subr.bf16.mxu0 0
  %617 = vmatpush1.bf16.msra.mxu0 0
  %618 = vmatprep.subr.bf16.mxu0 0
  %619 = vmatpush1.bf16.msra.mxu0 0
  %620 = vmatprep.subr.bf16.mxu0 0
  %621 = vmatpush1.bf16.msra.mxu0 0
  %622 = vmatprep.mubr.bf16.mxu0 0
  %623 = vmatmul.mubr.bf16.gmra.mrb[0].mxu0 %v465
  %v624 = vpop.f32.mrb[0].mxu0
  %v625 = vadd.f32 %v584, %v624
  %v626 = vpop.f32.mrb[0].mxu0
  %v627 = vpop.f32.mrb[0].mxu0
  %v628 = vadd.f32 %v587, %v627
  %v629 = vpop.f32.mrb[0].mxu0
  %630 = vdwg.mxu0
  %v631 = vmax.f32 %v625, 0.0
  %v632 = vmax.f32 %v628, 0.0
  %v633 = vpack.c.bf16 %v632, %v631
  %v634 = vld [vmem:[%s3] sm:$0xff]
  %v635 = vld [vmem:[%s3 + $0x8] sm:$0xff]
  %v636 = vld [vmem:[%s3 + $0x10] sm:$0xff]
  %v637 = vld [vmem:[%s3 + $0x18] sm:$0xf]
  %v638 = vld [vmem:[%s3 + $0x1c] sm:$0xff]
  %v639 = vld [vmem:[%s3 + $0x24] sm:$0xff]
  %v640 = vld [vmem:[%s3 + $0x2c] sm:$0xff]
  %v641 = vld [vmem:[%s3 + $0x34] sm:$0xf]
  %v642 = vld [vmem:[%s3 + $0x38] sm:$0xff]
  %v643 = vld [vmem:[%s3 + $0x40] sm:$0xff]
  %v644 = vld [vmem:[%s3 + $0x48] sm:$0xff]
  %v645 = vld [vmem:[%s3 + $0x50] sm:$0xf]
  %v646 = vld [vmem:[%s3 + $0x54] sm:$0xff]
  %v647 = vld [vmem:[%s3 + $0x5c] sm:$0xff]
  %v648 = vld [vmem:[%s3 + $0x64] sm:$0xff]
  %v649 = vld [vmem:[%s3 + $0x6c] sm:$0xf]
  %v650 = vld [vmem:[%s3 + $0x70] sm:$0xff]
  %v651 = vld [vmem:[%s3 + $0x78] sm:$0xff]
  %v652 = vld [vmem:[%s3 + $0x80] sm:$0xff]
  %v653 = vld [vmem:[%s3 + $0x88] sm:$0xf]
  %v654 = vld [vmem:[%s3 + $0x8c] sm:$0xff]
  %v655 = vld [vmem:[%s3 + $0x94] sm:$0xff]
  %v656 = vld [vmem:[%s3 + $0x9c] sm:$0xff]
  %v657 = vld [vmem:[%s3 + $0xa4] sm:$0xf]
  %v658 = vld [vmem:[%s3 + $0xa8] sm:$0xff]
  %v659 = vld [vmem:[%s3 + $0xb0] sm:$0xff]
  %v660 = vld [vmem:[%s3 + $0xb8] sm:$0xff]
  %v661 = vld [vmem:[%s3 + $0xc0] sm:$0xf]
  %v662 = vld [vmem:[%s3 + $0xc4] sm:$0xff]
  %v663 = vld [vmem:[%s3 + $0xcc] sm:$0xff]
  %v664 = vld [vmem:[%s3 + $0xd4] sm:$0xff]
  %v665 = vld [vmem:[%s3 + $0xdc] sm:$0xf]
  %v666 = vld [vmem:[%s3 + $0xe0] sm:$0xff]
  %v667 = vld [vmem:[%s3 + $0xe8] sm:$0xff]
  %v668 = vld [vmem:[%s3 + $0xf0] sm:$0xff]
  %v669 = vld [vmem:[%s3 + $0xf8] sm:$0xf]
  %v670 = vld [vmem:[%s3 + $0xfc] sm:$0xff]
  %v671 = vld [vmem:[%s3 + $0x104] sm:$0xff]
  %v672 = vld [vmem:[%s3 + $0x10c] sm:$0xff]
  %v673 = vld [vmem:[%s3 + $0x114] sm:$0xf]
  %v674 = vld [vmem:[%s3 + $0x118] sm:$0xff]
  %v675 = vld [vmem:[%s3 + $0x120] sm:$0xff]
  %v676 = vld [vmem:[%s3 + $0x128] sm:$0xff]
  %v677 = vld [vmem:[%s3 + $0x130] sm:$0xf]
  %v678 = vld [vmem:[%s3 + $0x134] sm:$0xff]
  %v679 = vld [vmem:[%s3 + $0x13c] sm:$0xff]
  %v680 = vld [vmem:[%s3 + $0x144] sm:$0xff]
  %v681 = vld [vmem:[%s3 + $0x14c] sm:$0xf]
  %v682 = vld [vmem:[%s3 + $0x150] sm:$0xff]
  %v683 = vld [vmem:[%s3 + $0x158] sm:$0xff]
  %v684 = vld [vmem:[%s3 + $0x160] sm:$0xff]
  %v685 = vld [vmem:[%s3 + $0x168] sm:$0xf]
  %v686 = vld [vmem:[%s3 + $0x16c] sm:$0xff]
  %v687 = vld [vmem:[%s3 + $0x174] sm:$0xff]
  %v688 = vld [vmem:[%s3 + $0x17c] sm:$0xff]
  %v689 = vld [vmem:[%s3 + $0x184] sm:$0xf]
  %v690 = vld [vmem:[%s3 + $0x188] sm:$0xff]
  %v691 = vld [vmem:[%s3 + $0x190] sm:$0xff]
  %v692 = vld [vmem:[%s3 + $0x198] sm:$0xff]
  %v693 = vld [vmem:[%s3 + $0x1a0] sm:$0xf]
  %v694 = vld [vmem:[%s3 + $0x1a4] sm:$0xff]
  %v695 = vld [vmem:[%s3 + $0x1ac] sm:$0xff]
  %v696 = vld [vmem:[%s3 + $0x1b4] sm:$0xff]
  %v697 = vld [vmem:[%s3 + $0x1bc] sm:$0xf]
  %v698 = vld [vmem:[%s4] sm:$0x7f]
  %v700 = vlaneseq
  %v701 = vshrl.u32 %v700, 7
  %v702 = vsub.s32 0, %v701
  %v703 = vrot.slane %v698, %v702
  %v704 = vlaneseq
  %v705 = vshrl.u32 %v704, 7
  %v706 = vsub.s32 1, %v705
  %v707 = vrot.slane %v698, %v706
  %v708 = vlaneseq
  %v709 = vshrl.u32 %v708, 7
  %v710 = vsub.s32 2, %v709
  %v711 = vrot.slane %v698, %v710
  %v712 = vlaneseq
  %v713 = vshrl.u32 %v712, 7
  %v714 = vsub.s32 3, %v713
  %v715 = vrot.slane %v698, %v714
  %v716 = vlaneseq
  %v717 = vshrl.u32 %v716, 7
  %v718 = vsub.s32 4, %v717
  %v719 = vrot.slane %v698, %v718
  %v720 = vlaneseq
  %v721 = vshrl.u32 %v720, 7
  %v722 = vsub.s32 5, %v721
  %v723 = vrot.slane %v698, %v722
  %v724 = vlaneseq
  %v725 = vshrl.u32 %v724, 7
  %v726 = vsub.s32 6, %v725
  %v727 = vrot.slane %v698, %v726
  %v799 = vunpack.c.l.b16 %v634
  %v800 = vunpack.c.h.b16 %v634
  %v801 = vunpack.c.l.b16 %v635
  %v802 = vunpack.c.h.b16 %v635
  %v803 = vunpack.c.l.b16 %v636
  %v804 = vunpack.c.h.b16 %v636
  %v805 = vunpack.c.l.b16 %v637
  %v806 = vunpack.c.l.b16 %v638
  %v807 = vunpack.c.h.b16 %v638
  %v808 = vunpack.c.l.b16 %v639
  %v809 = vunpack.c.h.b16 %v639
  %v810 = vunpack.c.l.b16 %v640
  %v811 = vunpack.c.h.b16 %v640
  %v812 = vunpack.c.l.b16 %v641
  %v813 = vunpack.c.l.b16 %v642
  %v814 = vunpack.c.h.b16 %v642
  %v815 = vunpack.c.l.b16 %v643
  %v816 = vunpack.c.h.b16 %v643
  %v817 = vunpack.c.l.b16 %v644
  %v818 = vunpack.c.h.b16 %v644
  %v819 = vunpack.c.l.b16 %v645
  %v820 = vunpack.c.l.b16 %v646
  %v821 = vunpack.c.h.b16 %v646
  %v822 = vunpack.c.l.b16 %v647
  %v823 = vunpack.c.h.b16 %v647
  %v824 = vunpack.c.l.b16 %v648
  %v825 = vunpack.c.h.b16 %v648
  %v826 = vunpack.c.l.b16 %v649
  %v827 = vunpack.c.l.b16 %v650
  %v828 = vunpack.c.h.b16 %v650
  %v829 = vunpack.c.l.b16 %v651
  %v830 = vunpack.c.h.b16 %v651
  %v831 = vunpack.c.l.b16 %v652
  %v832 = vunpack.c.h.b16 %v652
  %v833 = vunpack.c.l.b16 %v653
  %v834 = vunpack.c.l.b16 %v654
  %v835 = vunpack.c.h.b16 %v654
  %v836 = vunpack.c.l.b16 %v655
  %v837 = vunpack.c.h.b16 %v655
  %v838 = vunpack.c.l.b16 %v656
  %v839 = vunpack.c.h.b16 %v656
  %v840 = vunpack.c.l.b16 %v657
  %v841 = vunpack.c.l.b16 %v658
  %v842 = vunpack.c.h.b16 %v658
  %v843 = vunpack.c.l.b16 %v659
  %v844 = vunpack.c.h.b16 %v659
  %v845 = vunpack.c.l.b16 %v660
  %v846 = vunpack.c.h.b16 %v660
  %v847 = vunpack.c.l.b16 %v661
  %v848 = vunpack.c.l.b16 %v662
  %v849 = vunpack.c.h.b16 %v662
  %v850 = vunpack.c.l.b16 %v663
  %v851 = vunpack.c.h.b16 %v663
  %v852 = vunpack.c.l.b16 %v664
  %v853 = vunpack.c.h.b16 %v664
  %v854 = vunpack.c.l.b16 %v665
  %v855 = vunpack.c.l.b16 %v666
  %v856 = vunpack.c.h.b16 %v666
  %v857 = vunpack.c.l.b16 %v667
  %v858 = vunpack.c.h.b16 %v667
  %v859 = vunpack.c.l.b16 %v668
  %v860 = vunpack.c.h.b16 %v668
  %v861 = vunpack.c.l.b16 %v669
  %v862 = vunpack.c.l.b16 %v670
  %v863 = vunpack.c.h.b16 %v670
  %v864 = vunpack.c.l.b16 %v671
  %v865 = vunpack.c.h.b16 %v671
  %v866 = vunpack.c.l.b16 %v672
  %v867 = vunpack.c.h.b16 %v672
  %v868 = vunpack.c.l.b16 %v673
  %v869 = vunpack.c.l.b16 %v674
  %v870 = vunpack.c.h.b16 %v674
  %v871 = vunpack.c.l.b16 %v675
  %v872 = vunpack.c.h.b16 %v675
  %v873 = vunpack.c.l.b16 %v676
  %v874 = vunpack.c.h.b16 %v676
  %v875 = vunpack.c.l.b16 %v677
  %v876 = vunpack.c.l.b16 %v678
  %v877 = vunpack.c.h.b16 %v678
  %v878 = vunpack.c.l.b16 %v679
  %v879 = vunpack.c.h.b16 %v679
  %v880 = vunpack.c.l.b16 %v680
  %v881 = vunpack.c.h.b16 %v680
  %v882 = vunpack.c.l.b16 %v681
  %v883 = vunpack.c.l.b16 %v682
  %v884 = vunpack.c.h.b16 %v682
  %v885 = vunpack.c.l.b16 %v683
  %v886 = vunpack.c.h.b16 %v683
  %v887 = vunpack.c.l.b16 %v684
  %v888 = vunpack.c.h.b16 %v684
  %v889 = vunpack.c.l.b16 %v685
  %v890 = vunpack.c.l.b16 %v686
  %v891 = vunpack.c.h.b16 %v686
  %v892 = vunpack.c.l.b16 %v687
  %v893 = vunpack.c.h.b16 %v687
  %v894 = vunpack.c.l.b16 %v688
  %v895 = vunpack.c.h.b16 %v688
  %v896 = vunpack.c.l.b16 %v689
  %v897 = vunpack.c.l.b16 %v690
  %v898 = vunpack.c.h.b16 %v690
  %v899 = vunpack.c.l.b16 %v691
  %v900 = vunpack.c.h.b16 %v691
  %v901 = vunpack.c.l.b16 %v692
  %v902 = vunpack.c.h.b16 %v692
  %v903 = vunpack.c.l.b16 %v693
  %v904 = vunpack.c.l.b16 %v694
  %v905 = vunpack.c.h.b16 %v694
  %v906 = vunpack.c.l.b16 %v695
  %v907 = vunpack.c.h.b16 %v695
  %v908 = vunpack.c.l.b16 %v696
  %v909 = vunpack.c.h.b16 %v696
  %v910 = vunpack.c.l.b16 %v697
  %v911 = vpack.c.b16 %v806, %v799
  %v912 = vpack.c.b16 %v807, %v800
  %v913 = vpack.c.b16 %v808, %v801
  %v914 = vpack.c.b16 %v809, %v802
  %v915 = vpack.c.b16 %v810, %v803
  %v916 = vpack.c.b16 %v811, %v804
  %v917 = vpack.c.b16 %v812, %v805
  %v918 = vpack.c.b16 %v820, %v813
  %v919 = vpack.c.b16 %v821, %v814
  %v920 = vpack.c.b16 %v822, %v815
  %v921 = vpack.c.b16 %v823, %v816
  %v922 = vpack.c.b16 %v824, %v817
  %v923 = vpack.c.b16 %v825, %v818
  %v924 = vpack.c.b16 %v826, %v819
  %v925 = vpack.c.b16 %v834, %v827
  %v926 = vpack.c.b16 %v835, %v828
  %v927 = vpack.c.b16 %v836, %v829
  %v928 = vpack.c.b16 %v837, %v830
  %v929 = vpack.c.b16 %v838, %v831
  %v930 = vpack.c.b16 %v839, %v832
  %v931 = vpack.c.b16 %v840, %v833
  %v932 = vpack.c.b16 %v848, %v841
  %v933 = vpack.c.b16 %v849, %v842
  %v934 = vpack.c.b16 %v850, %v843
  %v935 = vpack.c.b16 %v851, %v844
  %v936 = vpack.c.b16 %v852, %v845
  %v937 = vpack.c.b16 %v853, %v846
  %v938 = vpack.c.b16 %v854, %v847
  %v939 = vpack.c.b16 %v862, %v855
  %v940 = vpack.c.b16 %v863, %v856
  %v941 = vpack.c.b16 %v864, %v857
  %v942 = vpack.c.b16 %v865, %v858
  %v943 = vpack.c.b16 %v866, %v859
  %v944 = vpack.c.b16 %v867, %v860
  %v945 = vpack.c.b16 %v868, %v861
  %v946 = vpack.c.b16 %v876, %v869
  %v947 = vpack.c.b16 %v877, %v870
  %v948 = vpack.c.b16 %v878, %v871
  %v949 = vpack.c.b16 %v879, %v872
  %v950 = vpack.c.b16 %v880, %v873
  %v951 = vpack.c.b16 %v881, %v874
  %v952 = vpack.c.b16 %v882, %v875
  %v953 = vpack.c.b16 %v890, %v883
  %v954 = vpack.c.b16 %v891, %v884
  %v955 = vpack.c.b16 %v892, %v885
  %v956 = vpack.c.b16 %v893, %v886
  %v957 = vpack.c.b16 %v894, %v887
  %v958 = vpack.c.b16 %v895, %v888
  %v959 = vpack.c.b16 %v896, %v889
  %v960 = vpack.c.b16 %v904, %v897
  %v961 = vpack.c.b16 %v905, %v898
  %v962 = vpack.c.b16 %v906, %v899
  %v963 = vpack.c.b16 %v907, %v900
  %v964 = vpack.c.b16 %v908, %v901
  %v965 = vpack.c.b16 %v909, %v902
  %v966 = vpack.c.b16 %v910, %v903
  %1023 = vmatprep.subr.bf16.mxu0 %v912
  %1024 = vmatpush1.bf16.msra.mxu0 %v911
  %1025 = vmatprep.subr.bf16.mxu0 %v919
  %1026 = vmatpush1.bf16.msra.mxu0 %v918
  %1027 = vmatprep.subr.bf16.mxu0 %v926
  %1028 = vmatpush1.bf16.msra.mxu0 %v925
  %1029 = vmatprep.subr.bf16.mxu0 %v933
  %1030 = vmatpush1.bf16.msra.mxu0 %v932
  %1031 = vmatprep.subr.bf16.mxu0 %v940
  %1032 = vmatpush1.bf16.msra.mxu0 %v939
  %1033 = vmatprep.subr.bf16.mxu0 %v947
  %1034 = vmatpush1.bf16.msra.mxu0 %v946
  %1035 = vmatprep.subr.bf16.mxu0 %v954
  %1036 = vmatpush1.bf16.msra.mxu0 %v953
  %1037 = vmatprep.subr.bf16.mxu0 %v961
  %1038 = vmatpush1.bf16.msra.mxu0 %v960
  %1039 = vmatprep.subr.bf16.mxu0 0
  %1040 = vmatpush1.bf16.msra.mxu0 0
  %1041 = vmatprep.subr.bf16.mxu0 0
  %1042 = vmatpush1.bf16.msra.mxu0 0
  %1043 = vmatprep.subr.bf16.mxu0 0
  %1044 = vmatpush1.bf16.msra.mxu0 0
  %1045 = vmatprep.subr.bf16.mxu0 0
  %1046 = vmatpush1.bf16.msra.mxu0 0
  %1047 = vmatprep.subr.bf16.mxu0 0
  %1048 = vmatpush1.bf16.msra.mxu0 0
  %1049 = vmatprep.subr.bf16.mxu0 0
  %1050 = vmatpush1.bf16.msra.mxu0 0
  %1051 = vmatprep.subr.bf16.mxu0 0
  %1052 = vmatpush1.bf16.msra.mxu0 0
  %1053 = vmatprep.subr.bf16.mxu0 0
  %1054 = vmatpush1.bf16.msra.mxu0 0
  %1055 = vmatprep.mubr.bf16.mxu0 0
  %1056 = vmatmul.mubr.bf16.gmra.mrb[0].mxu0 %v633
  %v1057 = vpop.f32.mrb[0].mxu0
  %v1058 = vadd.f32 %v703, %v1057
  %v1059 = vpop.f32.mrb[0].mxu0
  %v1060 = vadd.f32 %v707, %v1059
  %v1061 = vpop.f32.mrb[0].mxu0
  %v1062 = vadd.f32 %v703, %v1061
  %v1063 = vpop.f32.mrb[0].mxu0
  %v1064 = vadd.f32 %v707, %v1063
  %1065 = vdwg.mxu0
  %1066 = vmatprep.subr.bf16.mxu0 %v914
  %1067 = vmatpush1.bf16.msra.mxu0 %v913
  %1068 = vmatprep.subr.bf16.mxu0 %v921
  %1069 = vmatpush1.bf16.msra.mxu0 %v920
  %1070 = vmatprep.subr.bf16.mxu0 %v928
  %1071 = vmatpush1.bf16.msra.mxu0 %v927
  %1072 = vmatprep.subr.bf16.mxu0 %v935
  %1073 = vmatpush1.bf16.msra.mxu0 %v934
  %1074 = vmatprep.subr.bf16.mxu0 %v942
  %1075 = vmatpush1.bf16.msra.mxu0 %v941
  %1076 = vmatprep.subr.bf16.mxu0 %v949
  %1077 = vmatpush1.bf16.msra.mxu0 %v948
  %1078 = vmatprep.subr.bf16.mxu0 %v956
  %1079 = vmatpush1.bf16.msra.mxu0 %v955
  %1080 = vmatprep.subr.bf16.mxu0 %v963
  %1081 = vmatpush1.bf16.msra.mxu0 %v962
  %1082 = vmatprep.subr.bf16.mxu0 0
  %1083 = vmatpush1.bf16.msra.mxu0 0
  %1084 = vmatprep.subr.bf16.mxu0 0
  %1085 = vmatpush1.bf16.msra.mxu0 0
  %1086 = vmatprep.subr.bf16.mxu0 0
  %1087 = vmatpush1.bf16.msra.mxu0 0
  %1088 = vmatprep.subr.bf16.mxu0 0
  %1089 = vmatpush1.bf16.msra.mxu0 0
  %1090 = vmatprep.subr.bf16.mxu0 0
  %1091 = vmatpush1.bf16.msra.mxu0 0
  %1092 = vmatprep.subr.bf16.mxu0 0
  %1093 = vmatpush1.bf16.msra.mxu0 0
  %1094 = vmatprep.subr.bf16.mxu0 0
  %1095 = vmatpush1.bf16.msra.mxu0 0
  %1096 = vmatprep.subr.bf16.mxu0 0
  %1097 = vmatpush1.bf16.msra.mxu0 0
  %1098 = vmatprep.mubr.bf16.mxu0 0
  %1099 = vmatmul.mubr.bf16.gmra.mrb[0].mxu0 %v633
  %v1100 = vpop.f32.mrb[0].mxu0
  %v1101 = vadd.f32 %v711, %v1100
  %v1102 = vpop.f32.mrb[0].mxu0
  %v1103 = vadd.f32 %v715, %v1102
  %v1104 = vpop.f32.mrb[0].mxu0
  %v1105 = vadd.f32 %v711, %v1104
  %v1106 = vpop.f32.mrb[0].mxu0
  %v1107 = vadd.f32 %v715, %v1106
  %1108 = vdwg.mxu0
  %1109 = vmatprep.subr.bf16.mxu0 %v916
  %1110 = vmatpush1.bf16.msra.mxu0 %v915
  %1111 = vmatprep.subr.bf16.mxu0 %v923
  %1112 = vmatpush1.bf16.msra.mxu0 %v922
  %1113 = vmatprep.subr.bf16.mxu0 %v930
  %1114 = vmatpush1.bf16.msra.mxu0 %v929
  %1115 = vmatprep.subr.bf16.mxu0 %v937
  %1116 = vmatpush1.bf16.msra.mxu0 %v936
  %1117 = vmatprep.subr.bf16.mxu0 %v944
  %1118 = vmatpush1.bf16.msra.mxu0 %v943
  %1119 = vmatprep.subr.bf16.mxu0 %v951
  %1120 = vmatpush1.bf16.msra.mxu0 %v950
  %1121 = vmatprep.subr.bf16.mxu0 %v958
  %1122 = vmatpush1.bf16.msra.mxu0 %v957
  %1123 = vmatprep.subr.bf16.mxu0 %v965
  %1124 = vmatpush1.bf16.msra.mxu0 %v964
  %1125 = vmatprep.subr.bf16.mxu0 0
  %1126 = vmatpush1.bf16.msra.mxu0 0
  %1127 = vmatprep.subr.bf16.mxu0 0
  %1128 = vmatpush1.bf16.msra.mxu0 0
  %1129 = vmatprep.subr.bf16.mxu0 0
  %1130 = vmatpush1.bf16.msra.mxu0 0
  %1131 = vmatprep.subr.bf16.mxu0 0
  %1132 = vmatpush1.bf16.msra.mxu0 0
  %1133 = vmatprep.subr.bf16.mxu0 0
  %1134 = vmatpush1.bf16.msra.mxu0 0
  %1135 = vmatprep.subr.bf16.mxu0 0
  %1136 = vmatpush1.bf16.msra.mxu0 0
  %1137 = vmatprep.subr.bf16.mxu0 0
  %1138 = vmatpush1.bf16.msra.mxu0 0
  %1139 = vmatprep.subr.bf16.mxu0 0
  %1140 = vmatpush1.bf16.msra.mxu0 0
  %1141 = vmatprep.mubr.bf16.mxu0 0
  %1142 = vmatmul.mubr.bf16.gmra.mrb[0].mxu0 %v633
  %v1143 = vpop.f32.mrb[0].mxu0
  %v1144 = vadd.f32 %v719, %v1143
  %v1145 = vpop.f32.mrb[0].mxu0
  %v1146 = vadd.f32 %v723, %v1145
  %v1147 = vpop.f32.mrb[0].mxu0
  %v1148 = vadd.f32 %v719, %v1147
  %v1149 = vpop.f32.mrb[0].mxu0
  %v1150 = vadd.f32 %v723, %v1149
  %1151 = vdwg.mxu0
  %1152 = vmatprep.subr.bf16.mxu0 0
  %1153 = vmatpush1.bf16.msra.mxu0 %v917
  %1154 = vmatprep.subr.bf16.mxu0 0
  %1155 = vmatpush1.bf16.msra.mxu0 %v924
  %1156 = vmatprep.subr.bf16.mxu0 0
  %1157 = vmatpush1.bf16.msra.mxu0 %v931
  %1158 = vmatprep.subr.bf16.mxu0 0
  %1159 = vmatpush1.bf16.msra.mxu0 %v938
  %1160 = vmatprep.subr.bf16.mxu0 0
  %1161 = vmatpush1.bf16.msra.mxu0 %v945
  %1162 = vmatprep.subr.bf16.mxu0 0
  %1163 = vmatpush1.bf16.msra.mxu0 %v952
  %1164 = vmatprep.subr.bf16.mxu0 0
  %1165 = vmatpush1.bf16.msra.mxu0 %v959
  %1166 = vmatprep.subr.bf16.mxu0 0
  %1167 = vmatpush1.bf16.msra.mxu0 %v966
  %1168 = vmatprep.subr.bf16.mxu0 0
  %1169 = vmatpush1.bf16.msra.mxu0 0
  %1170 = vmatprep.subr.bf16.mxu0 0
  %1171 = vmatpush1.bf16.msra.mxu0 0
  %1172 = vmatprep.subr.bf16.mxu0 0
  %1173 = vmatpush1.bf16.msra.mxu0 0
  %1174 = vmatprep.subr.bf16.mxu0 0
  %1175 = vmatpush1.bf16.msra.mxu0 0
  %1176 = vmatprep.subr.bf16.mxu0 0
  %1177 = vmatpush1.bf16.msra.mxu0 0
  %1178 = vmatprep.subr.bf16.mxu0 0
  %1179 = vmatpush1.bf16.msra.mxu0 0
  %1180 = vmatprep.subr.bf16.mxu0 0
  %1181 = vmatpush1.bf16.msra.mxu0 0
  %1182 = vmatprep.subr.bf16.mxu0 0
  %1183 = vmatpush1.bf16.msra.mxu0 0
  %1184 = vmatprep.mubr.bf16.mxu0 0
  %1185 = vmatmul.mubr.bf16.gmra.mrb[0].mxu0 %v633
  %v1186 = vpop.f32.mrb[0].mxu0
  %v1187 = vadd.f32 %v727, %v1186
  %v1188 = vpop.f32.mrb[0].mxu0
  %v1189 = vpop.f32.mrb[0].mxu0
  %v1190 = vadd.f32 %v727, %v1189
  %v1191 = vpop.f32.mrb[0].mxu0
  %1192 = vdwg.mxu0
  %v1193 = vmax.f32 %v1058, 0.0
  %v1194 = vmax.f32 %v1060, 0.0
  %v1195 = vmax.f32 %v1101, 0.0
  %v1196 = vmax.f32 %v1103, 0.0
  %v1197 = vmax.f32 %v1144, 0.0
  %v1198 = vmax.f32 %v1146, 0.0
  %v1199 = vmax.f32 %v1187, 0.0
  %v1200 = vmax.f32 %v1062, 0.0
  %v1201 = vmax.f32 %v1064, 0.0
  %v1202 = vmax.f32 %v1105, 0.0
  %v1203 = vmax.f32 %v1107, 0.0
  %v1204 = vmax.f32 %v1148, 0.0
  %v1205 = vmax.f32 %v1150, 0.0
  %v1206 = vmax.f32 %v1190, 0.0
  %v1207 = vpack.c.bf16 %v1200, %v1193
  %v1208 = vpack.c.bf16 %v1201, %v1194
  %v1209 = vpack.c.bf16 %v1202, %v1195
  %v1210 = vpack.c.bf16 %v1203, %v1196
  %v1211 = vpack.c.bf16 %v1204, %v1197
  %v1212 = vpack.c.bf16 %v1205, %v1198
  %v1213 = vpack.c.bf16 %v1206, %v1199
  %v1221 = vunpack.c.l.b16 %v1207
  %v1222 = vunpack.c.l.b16 %v1208
  %v1223 = vunpack.c.l.b16 %v1209
  %v1224 = vunpack.c.l.b16 %v1210
  %v1225 = vunpack.c.l.b16 %v1211
  %v1226 = vunpack.c.l.b16 %v1212
  %v1227 = vunpack.c.l.b16 %v1213
  %v1228 = vunpack.c.h.b16 %v1207
  %v1229 = vunpack.c.h.b16 %v1208
  %v1230 = vunpack.c.h.b16 %v1209
  %v1231 = vunpack.c.h.b16 %v1210
  %v1232 = vunpack.c.h.b16 %v1211
  %v1233 = vunpack.c.h.b16 %v1212
  %v1234 = vunpack.c.h.b16 %v1213
  %v1235 = vpack.c.b16 %v1222, %v1221
  %v1236 = vpack.c.b16 %v1224, %v1223
  %v1237 = vpack.c.b16 %v1226, %v1225
  %v1238 = vpack.c.b16 %v1227, %v1227
  %v1239 = vpack.c.b16 %v1229, %v1228
  %v1240 = vpack.c.b16 %v1231, %v1230
  %v1241 = vpack.c.b16 %v1233, %v1232
  %v1242 = vpack.c.b16 %v1234, %v1234
  %1251 = vst [vmem:[%s5] sm:$0xff] %v1235
  %1252 = vst [vmem:[%s5 + $0x8] sm:$0xff] %v1236
  %1253 = vst [vmem:[%s5 + $0x10] sm:$0xff] %v1237
  %vm1254 = vcmask 125952
  %1255 = vst.msk [vmem:[%s5 + $0x18] sm:$0xf] %vm1254, %v1238
  %1256 = vst [vmem:[%s5 + $0x1c] sm:$0xff] %v1239
  %1257 = vst [vmem:[%s5 + $0x24] sm:$0xff] %v1240
  %1258 = vst [vmem:[%s5 + $0x2c] sm:$0xff] %v1241
  %1259 = vst.msk [vmem:[%s5 + $0x34] sm:$0xf] %vm1254, %v1242
  // Predicated region
  $region22: #{autoencoder_forward.1} parent=0 // pred_check
    _
  $region23: #{autoencoder_forward.1} parent=0 // pred_check_branch
    %1261 = sbr.rel (0) target = $region25
  $region24: #{autoencoder_forward.1} parent=0 // pred_region
    _
  $region25: #{autoencoder_forward.1} parent=0 // pred_fallthru
    _
  // Predicated region
  $region26: #{autoencoder_forward.1} parent=0 // pred_check
    _
  $region27: #{autoencoder_forward.1} parent=0 // pred_check_branch
    %1263 = sbr.rel (0) target = $region29
  $region28: #{autoencoder_forward.1} parent=0 // pred_region
    _
  $region29: #{autoencoder_forward.1} parent=0 // pred_fallthru
    _

</llo_original>
